<compile_context>
chip_gen: v7x
topology: tpu7x:2x2x1
jax: 0.10.0
libtpu: 0.0.40
codegen_flags: <defaults>
</compile_context>

<pallas_src>
import functools

import jax
import jax.numpy as jnp
from jax.experimental import pallas as pl
from jax.experimental.pallas import tpu as pltpu


# ----------------------------- kernels --------------------------------------


def _ffn_step(x_ref, w1_ref, b1_ref, w2_ref, acc_ref, inner):
    """acc += relu(x @ W1_j + b1_j) @ W2_j with f32 accumulation.

    `inner` statically splits the tn4 tile so the VPU epilogue of sub-chunk c
    overlaps the MXU pushes of sub-chunk c+1.
    """
    tn4 = w1_ref.shape[1]
    step = tn4 // inner
    for c in range(inner):
        lo, hi = c * step, (c + 1) * step
        h = jnp.dot(x_ref[...], w1_ref[:, lo:hi],
                    preferred_element_type=jnp.float32)
        h = jnp.maximum(h + b1_ref[:, lo:hi].astype(jnp.float32), 0.0)
        acc_ref[...] += jnp.dot(h.astype(w2_ref.dtype), w2_ref[lo:hi, :],
                                preferred_element_type=jnp.float32)


def ffn_kernel_f32out(x_ref, w1_ref, b1_ref, w2_ref, b2_ref, o_ref, *, inner):
    """f32 output: accumulate directly into the resident output block."""
    j = pl.program_id(1)

    @pl.when(j == 0)
    def _init():
        o_ref[...] = jnp.zeros_like(o_ref)

    _ffn_step(x_ref, w1_ref, b1_ref, w2_ref, o_ref, inner)

    @pl.when(j == pl.num_programs(1) - 1)
    def _finalize():
        o_ref[...] += b2_ref[...].astype(jnp.float32)


def ffn_kernel_acc(x_ref, w1_ref, b1_ref, w2_ref, b2_ref, o_ref, acc_ref, *, inner):
    """Non-f32 output: f32 VMEM accumulator, cast once at finalize."""
    j = pl.program_id(1)

    @pl.when(j == 0)
    def _init():
        acc_ref[...] = jnp.zeros_like(acc_ref)

    _ffn_step(x_ref, w1_ref, b1_ref, w2_ref, acc_ref, inner)

    @pl.when(j == pl.num_programs(1) - 1)
    def _finalize():
        o_ref[...] = (acc_ref[...] + b2_ref[...].astype(jnp.float32)
                      ).astype(o_ref.dtype)


# ----------------------------- wrapper ---------------------------------------


def _round_up(v, m):
    return ((v + m - 1) // m) * m


def _tpu_generation_defaults():
    """Returns (tm_pref, tn4_pref, vmem_budget_bytes) for the local TPU."""
    kind = ""
    try:
        kind = jax.devices()[0].device_kind.lower()
    except Exception:
        pass
    vmem_cap = 128 * 1024 * 1024
    try:
        vmem_cap = int(pltpu.get_tpu_info().vmem_capacity_bytes)
    except Exception:
        if "v7" in kind:
            vmem_cap = 64 * 1024 * 1024
    budget = int(vmem_cap * 0.85)                 # ~15% headroom
    if vmem_cap <= 64 * 1024 * 1024:              # v7x-class: 64 MiB VMEM / TC
        return 512, 512, budget
    if "v5" in kind:                              # v5e: most HBM-bound
        return 512, 512, budget
    return 1024, 1024, budget                     # v6e-class: 128 MiB VMEM


def _fit_tiles(tm, tn4, H, in_itm, w_itm, out_itm, use_acc, budget):
    """Shrink (tn4 first, then tm) until the double-buffered working set fits."""
    def working_set(tm_, tn4_):
        ws = 2 * (tm_ * H * in_itm          # x tile
                  + H * tn4_ * w_itm        # W1 column slice
                  + 8 * tn4_ * 4            # b1 slice (sublane-padded)
                  + tn4_ * H * w_itm        # W2 row slice
                  + 8 * H * 4               # b2
                  + tm_ * H * out_itm)      # out tile
        if use_acc:
            ws += tm_ * H * 4               # resident f32 accumulator
        return ws

    while working_set(tm, tn4) > budget and tn4 > 256:
        tn4 //= 2
    while working_set(tm, tn4) > budget and tm > 256:
        tm //= 2
    while working_set(tm, tn4) > budget and tn4 > 128:
        tn4 //= 2
    while working_set(tm, tn4) > budget and tm > 8:
        tm = max(8, tm // 2)
    return tm, tn4


def prepare_params(w1, b1, w2, b2, compute_dtype=None):
    """One-time weight preparation (do this at init, NOT per call).

    Casts W1/W2 to the MXU operand dtype (bf16 pays off on v5e/v6e/v7x: halves
    the dominant weight DMA while accumulation stays f32). Biases stay f32
    because bias/ReLU math is done in f32 inside the kernel.
    """
    if compute_dtype is not None:
        w1 = w1.astype(compute_dtype)
        w2 = w2.astype(compute_dtype)
    return w1, jnp.asarray(b1, jnp.float32), w2, jnp.asarray(b2, jnp.float32)


def feed_forward(x, w1, b1, w2, b2, *, tm=None, tn4=None, interpret=False):
    """x: [..., H] -> [..., H]; matches nn.Linear(H,4H) + ReLU + nn.Linear(4H,H).

    Weights are consumed in the dtype they are supplied in (pre-cast once with
    `prepare_params`); only the activations are cast per call. Output dtype
    matches the input dtype; accumulation is always f32.
    """
    orig_shape = x.shape
    out_dtype = x.dtype
    H = orig_shape[-1]
    H4 = w1.shape[1]
    assert w1.shape == (H, H4) and w2.shape == (H4, H)
    assert b1.shape == (1, H4) and b2.shape == (1, H)

    x2d = x.reshape(-1, H).astype(w1.dtype)       # activation-only per-call cast
    T = x2d.shape[0]

    tm_pref, tn4_pref, vmem_budget = _tpu_generation_defaults()
    if tm is not None:
        tm_pref = tm
    if tn4 is not None:
        tn4_pref = tn4

    # ---- tile selection -----------------------------------------------------
    tm_ = min(tm_pref, _round_up(T, 8))           # sublane axis: mult of 8 or full
    if H4 <= tn4_pref:
        tn4_ = H4                                 # full-dim block (always legal)
    else:
        tn4_ = max(128, (tn4_pref // 128) * 128)
        # prefer a tn4 that divides 4H so weights never need per-call padding
        while tn4_ > 128 and H4 % tn4_ != 0:
            tn4_ -= 128

    use_acc = (jnp.dtype(out_dtype) != jnp.float32)
    in_itm = x2d.dtype.itemsize
    w_itm = w1.dtype.itemsize
    out_itm = jnp.dtype(out_dtype).itemsize
    tm_, tn4_ = _fit_tiles(tm_, tn4_, H, in_itm, w_itm, out_itm, use_acc,
                           vmem_budget)

    Tp = _round_up(T, tm_)
    H4p = _round_up(H4, tn4_)

    if Tp != T:
        x2d = jnp.pad(x2d, ((0, Tp - T), (0, 0)))
    if H4p != H4:
        # Rare fallback (4H not a multiple of 128). Padded columns contribute
        # relu(0)=0 through zero W2 rows, so semantics are unchanged.
        w1 = jnp.pad(w1, ((0, 0), (0, H4p - H4)))
        b1 = jnp.pad(b1, ((0, 0), (0, H4p - H4)))
        w2 = jnp.pad(w2, ((0, H4p - H4), (0, 0)))

    grid = (Tp // tm_, H4p // tn4_)
    inner = 2 if (tn4_ >= 256 and tn4_ % 256 == 0) else 1

    flops = 4 * Tp * H * H4p                      # two matmuls, 2 flops / MAC
    bytes_accessed = (x2d.size * in_itm + w1.size * w_itm
                      + b1.size * b1.dtype.itemsize + w2.size * w_itm
                      + b2.size * b2.dtype.itemsize + Tp * H * out_itm)
    cost = pl.CostEstimate(flops=int(flops), transcendentals=0,
                           bytes_accessed=int(bytes_accessed))

    in_specs = [
        pl.BlockSpec((tm_, H),  lambda i, j: (i, 0)),   # x tile (resident over j)
        pl.BlockSpec((H, tn4_), lambda i, j: (0, j)),   # W1 column slice
        pl.BlockSpec((1, tn4_), lambda i, j: (0, j)),   # b1 slice per j-step
        pl.BlockSpec((tn4_, H), lambda i, j: (j, 0)),   # W2 row slice
        pl.BlockSpec((1, H),    lambda i, j: (0, 0)),   # b2 (finalize only)
    ]
    out_spec = pl.BlockSpec((tm_, H), lambda i, j: (i, 0))

    if use_acc:
        kernel = functools.partial(ffn_kernel_acc, inner=inner)
        scratch = [pltpu.VMEM((tm_, H), jnp.float32)]
    else:
        kernel = functools.partial(ffn_kernel_f32out, inner=inner)
        scratch = []

    # Note: for tiny-T / decode shapes on v7x one could add a second parallel
    # grid axis over the output-H dim so both TensorCores have work; omitted
    # here since it re-streams W1 per output-H tile for the common large-T case.

    out = pl.pallas_call(
        kernel,
        out_shape=jax.ShapeDtypeStruct((Tp, H), out_dtype),
        grid_spec=pltpu.PrefetchScalarGridSpec(
            num_scalar_prefetch=0,
            grid=grid,
            in_specs=in_specs,
            out_specs=out_spec,
            scratch_shapes=scratch,
        ),
        compiler_params=pltpu.CompilerParams(
            dimension_semantics=("parallel", "arbitrary"),
            vmem_limit_bytes=int(vmem_budget)),
        cost_estimate=cost,
        interpret=interpret,
    )(x2d, w1, b1, w2, b2)

    if Tp != T:
        out = out[:T]
    return out.reshape(orig_shape)


def init_params(key, hidden_size, dtype=jnp.float32):
    """Deterministic init matching nn.Linear defaults; weights stored (in, out)
    so the kernel computes x @ W directly (torch stores (out, in))."""
    H, H4 = hidden_size, hidden_size * 4
    k1, k2, k3, k4 = jax.random.split(key, 4)
    lim1 = 1.0 / (H ** 0.5)
    lim2 = 1.0 / (H4 ** 0.5)
    w1 = jax.random.uniform(k1, (H, H4), dtype, minval=-lim1, maxval=lim1)
    b1 = jax.random.uniform(k2, (1, H4), dtype, minval=-lim1, maxval=lim1)
    w2 = jax.random.uniform(k3, (H4, H), dtype, minval=-lim2, maxval=lim2)
    b2 = jax.random.uniform(k4, (1, H), dtype, minval=-lim2, maxval=lim2)
    return w1, b1, w2, b2


if __name__ == "__main__":
    key = jax.random.PRNGKey(0)
    k_params, k_x = jax.random.split(key)

    batch, seq, hidden = 2, 8, 32
    w1, b1, w2, b2 = init_params(k_params, hidden)
    x = jax.random.normal(k_x, (batch, seq, hidden), dtype=jnp.float32)

    ref = jnp.maximum(x @ w1 + b1[0], 0.0) @ w2 + b2[0]

    # f32 path: exact check against the pure-JAX reference.
    y = feed_forward(x, w1, b1, w2, b2)
    jax.block_until_ready(y)
    assert y.shape == x.shape
    assert jnp.allclose(y, ref, atol=1e-5, rtol=1e-5)

    # bf16-operand path: weights pre-cast ONCE (production config on all TPU
    # generations); f32 accumulation retained -> tolerance only for bf16 rounding.
    w1b, b1b, w2b, b2b = prepare_params(w1, b1, w2, b2, compute_dtype=jnp.bfloat16)
    y_bf16 = feed_forward(x, w1b, b1b, w2b, b2b)
    jax.block_until_ready(y_bf16)
    assert y_bf16.shape == x.shape
    assert jnp.allclose(y_bf16, ref, atol=5e-2, rtol=5e-2)

    print("KERNEL_OK")
</pallas_src>

<mosaic_0001>
module attributes {stable_mosaic.version = 11 : i64} {
  func.func @ffn_kernel_f32out(%arg0: i32, %arg1: i32, %arg2: memref<16x32xf32, #tpu.memory_space<vmem>>, %arg3: memref<32x128xf32, #tpu.memory_space<vmem>>, %arg4: memref<1x128xf32, #tpu.memory_space<vmem>>, %arg5: memref<128x32xf32, #tpu.memory_space<vmem>>, %arg6: memref<1x32xf32, #tpu.memory_space<vmem>>, %arg7: memref<16x32xf32, #tpu.memory_space<vmem>>) attributes {dimension_semantics = [#tpu.dimension_semantics<parallel>, #tpu.dimension_semantics<arbitrary>], iteration_bounds = array<i64: 1, 1>, scalar_prefetch = 0 : i64, scratch_operands = 0 : i64, tpu.core_type = #tpu.core_type<tc>, window_params = [{transform_indices = @transform_0, window_bounds = array<i64: 16, 32>}, {transform_indices = @transform_1, window_bounds = array<i64: 32, 128>}, {transform_indices = @transform_2, window_bounds = array<i64: 1, 128>}, {transform_indices = @transform_3, window_bounds = array<i64: 128, 32>}, {pipeline_mode = #tpu.pipeline_mode<synchronous>, transform_indices = @transform_4, window_bounds = array<i64: 1, 32>}, {transform_indices = @transform_5, window_bounds = array<i64: 16, 32>}]} {
    %c0_i32 = arith.constant 0 : i32
    %0 = arith.cmpi eq, %arg1, %c0_i32 : i32
    %1 = arith.extui %0 : i1 to i32
    %c0_i32_0 = arith.constant 0 : i32
    %2 = arith.cmpi ne, %1, %c0_i32_0 : i32
    scf.if %2 {
      %cst_16 = arith.constant 0.000000e+00 : f32
      %19 = vector.broadcast %cst_16 : f32 to vector<16x32xf32>
      %c0_17 = arith.constant 0 : index
      %c0_18 = arith.constant 0 : index
      %20 = vector.load %arg7[%c0_17, %c0_18] : memref<16x32xf32, #tpu.memory_space<vmem>>, vector<16x32xf32>
      tpu.vector_store %arg7[%c0_17, %c0_18], %19 {strides = array<i32>} : memref<16x32xf32, #tpu.memory_space<vmem>>, vector<16x32xf32>,
    } else {
    }
    %c0 = arith.constant 0 : index
    %c0_1 = arith.constant 0 : index
    %3 = vector.load %arg2[%c0, %c0_1] : memref<16x32xf32, #tpu.memory_space<vmem>>, vector<16x32xf32>
    %c0_2 = arith.constant 0 : index
    %c0_3 = arith.constant 0 : index
    %4 = vector.load %arg3[%c0_2, %c0_3] : memref<32x128xf32, #tpu.memory_space<vmem>>, vector<32x128xf32>
    %cst = arith.constant dense<0.000000e+00> : vector<16x128xf32>
    %5 = tpu.matmul %3, %4, %cst {dimension_numbers = #tpu.dot_dimension_numbers<[1], [0], [0], [1], [0, 0, 1, 1], [], []>} : vector<16x32xf32>, vector<32x128xf32>, vector<16x128xf32> -> vector<16x128xf32>
    %c0_4 = arith.constant 0 : index
    %c0_5 = arith.constant 0 : index
    %6 = vector.load %arg4[%c0_4, %c0_5] : memref<1x128xf32, #tpu.memory_space<vmem>>, vector<1x128xf32>
    %7 = vector.broadcast %6 : vector<1x128xf32> to vector<16x128xf32>
    %8 = arith.addf %5, %7 : vector<16x128xf32>
    %cst_6 = arith.constant 0.000000e+00 : f32
    %9 = vector.broadcast %cst_6 : f32 to vector<16x128xf32>
    %10 = arith.maximumf %8, %9 : vector<16x128xf32>
    %c0_7 = arith.constant 0 : index
    %c0_8 = arith.constant 0 : index
    %11 = vector.load %arg7[%c0_7, %c0_8] : memref<16x32xf32, #tpu.memory_space<vmem>>, vector<16x32xf32>
    %c0_9 = arith.constant 0 : index
    %c0_10 = arith.constant 0 : index
    %12 = vector.load %arg5[%c0_9, %c0_10] : memref<128x32xf32, #tpu.memory_space<vmem>>, vector<128x32xf32>
    %cst_11 = arith.constant dense<0.000000e+00> : vector<16x32xf32>
    %13 = tpu.matmul %10, %12, %cst_11 {dimension_numbers = #tpu.dot_dimension_numbers<[1], [0], [0], [1], [0, 0, 1, 1], [], []>} : vector<16x128xf32>, vector<128x32xf32>, vector<16x32xf32> -> vector<16x32xf32>
    %14 = arith.addf %11, %13 : vector<16x32xf32>
    %c0_12 = arith.constant 0 : index
    %c0_13 = arith.constant 0 : index
    %15 = vector.load %arg7[%c0_12, %c0_13] : memref<16x32xf32, #tpu.memory_space<vmem>>, vector<16x32xf32>
    tpu.vector_store %arg7[%c0_12, %c0_13], %14 {strides = array<i32>} : memref<16x32xf32, #tpu.memory_space<vmem>>, vector<16x32xf32>,
    %c0_i32_14 = arith.constant 0 : i32
    %16 = arith.cmpi eq, %arg1, %c0_i32_14 : i32
    %17 = arith.extui %16 : i1 to i32
    %c0_i32_15 = arith.constant 0 : i32
    %18 = arith.cmpi ne, %17, %c0_i32_15 : i32
    scf.if %18 {
      %c0_16 = arith.constant 0 : index
      %c0_17 = arith.constant 0 : index
      %19 = vector.load %arg7[%c0_16, %c0_17] : memref<16x32xf32, #tpu.memory_space<vmem>>, vector<16x32xf32>
      %c0_18 = arith.constant 0 : index
      %c0_19 = arith.constant 0 : index
      %20 = vector.load %arg6[%c0_18, %c0_19] : memref<1x32xf32, #tpu.memory_space<vmem>>, vector<1x32xf32>
      %21 = vector.broadcast %20 : vector<1x32xf32> to vector<16x32xf32>
      %22 = arith.addf %19, %21 : vector<16x32xf32>
      %c0_20 = arith.constant 0 : index
      %c0_21 = arith.constant 0 : index
      %23 = vector.load %arg7[%c0_20, %c0_21] : memref<16x32xf32, #tpu.memory_space<vmem>>, vector<16x32xf32>
      tpu.vector_store %arg7[%c0_20, %c0_21], %22 {strides = array<i32>} : memref<16x32xf32, #tpu.memory_space<vmem>>, vector<16x32xf32>,
    } else {
    }
    return
  }
  func.func @transform_0(%arg0: i32, %arg1: i32) -> (i32, i32) {
    %c0_i32 = arith.constant 0 : i32
    %c0_i32_0 = arith.constant 0 : i32
    return %arg0, %c0_i32 : i32, i32
  }
  func.func @transform_1(%arg0: i32, %arg1: i32) -> (i32, i32) {
    %c0_i32 = arith.constant 0 : i32
    %c0_i32_0 = arith.constant 0 : i32
    return %c0_i32, %arg1 : i32, i32
  }
  func.func @transform_2(%arg0: i32, %arg1: i32) -> (i32, i32) {
    %c0_i32 = arith.constant 0 : i32
    %c0_i32_0 = arith.constant 0 : i32
    return %c0_i32, %arg1 : i32, i32
  }
  func.func @transform_3(%arg0: i32, %arg1: i32) -> (i32, i32) {
    %c0_i32 = arith.constant 0 : i32
    %c0_i32_0 = arith.constant 0 : i32
    return %arg1, %c0_i32 : i32, i32
  }
  func.func @transform_4(%arg0: i32, %arg1: i32) -> (i32, i32) {
    %c0_i32 = arith.constant 0 : i32
    %c0_i32_0 = arith.constant 0 : i32
    %c0_i32_1 = arith.constant 0 : i32
    return %c0_i32, %c0_i32_0 : i32, i32
  }
  func.func @transform_5(%arg0: i32, %arg1: i32) -> (i32, i32) {
    %c0_i32 = arith.constant 0 : i32
    %c0_i32_0 = arith.constant 0 : i32
    return %arg0, %c0_i32 : i32, i32
  }
}

</mosaic_0001>

<llo_original>
// kernel: tpu_custom_call.1
$region0: #{tpu_custom_call.1}
  #allocation0 [shape = 'u32[]', space=smem, size = 0x4, offset = 0x4, fixed_abs, tag = 'smem constant byte address 0x4 - core index']
  #allocation1 [shape = 'u32[144,128]{1,0:T(1,128)}', space=vmem, size = 0x12000, scoped, tag = 'internal scratch']
  %s0 = inlined_call_operand.hbm [shape: f32[16,32], index: 0, kind: input, shape index: {}]
  %s1 = inlined_call_operand.hbm [shape: f32[32,128], index: 1, kind: input, shape index: {}]
  %s2 = inlined_call_operand.hbm [shape: f32[1,128], index: 2, kind: input, shape index: {}]
  %s3 = inlined_call_operand.hbm [shape: f32[128,32], index: 3, kind: input, shape index: {}]
  %s4 = inlined_call_operand.hbm [shape: f32[1,32], index: 4, kind: input, shape index: {}]
  %s5 = inlined_call_operand.hbm [shape: f32[16,32], index: 5, kind: output, shape index: {}]
  %s6 = sld [smem:[#allocation0]]
  $region58: #{tpu_custom_call.1} parent=0
    _
  %s8 = ssub.s32 1, %s6
  %s9 = scalar_select 0, %s8, %s6
  $region1: #{tpu_custom_call.1} parent=0
    #allocation2 [shape = 'u8[8192]{0}', space=vmem, size = 0x2000, scoped, tag = 'input window, operand 0, single buffered']
    #allocation3 [shape = 's32[1]{0}', space=sflag, size = 0x4, scoped, tag = 'scoped memory for tpu_custom_call.1']
    #allocation4 [shape = 's32[1]{0}', space=sflag, size = 0x4, scoped, tag = 'scoped memory for tpu_custom_call.1']
    #allocation5 [shape = 'u8[16384]{0}', space=vmem, size = 0x4000, scoped, tag = 'input window, operand 1, single buffered']
    #allocation6 [shape = 's32[1]{0}', space=sflag, size = 0x4, scoped, tag = 'scoped memory for tpu_custom_call.1']
    #allocation7 [shape = 'u8[512]{0}', space=vmem, size = 0x400, scoped, tag = 'input window, operand 2, single buffered']
    #allocation8 [shape = 'u8[65536]{0}', space=vmem, size = 0x10000, scoped, tag = 'input window, operand 3, single buffered']
    #allocation9 [shape = 's32[1]{0}', space=sflag, size = 0x4, scoped, tag = 'scoped memory for tpu_custom_call.1']
    #allocation10 [shape = 'u8[512]{0}', space=vmem, size = 0x400, scoped, tag = 'input window, operand 4, single buffered']
    #allocation11 [shape = 'u8[8192]{0}', space=vmem, size = 0x2000, scoped, tag = 'output window, operand 0, single buffered']
    %10 = vsyncpa [#allocation3], 0
    %11 = vsyncpa [#allocation6], 0
    %12 = vsyncpa [#allocation9], 0
    %13 = vsyncpa [#allocation4], 0
    // Predicated region
    $region2: #{tpu_custom_call.1} parent=1 // pred_check
      _
    $region3: #{tpu_custom_call.1} parent=1 // pred_check_branch
      %15 = sbr.rel (0) target = $region5
    $region4: #{tpu_custom_call.1} parent=1 // pred_region
      %s17 = ssub.s32 256, 256
      %18 = vsyncadd [#allocation3], %s17
      %s19 = sshll.u32 [#allocation2], 4
      %s20 = int_to_ptr.vmem [resolvable:$true] %s19
      %25 = dma.hbm_to_vmem [thread:$0]  %s0, 256, %s20, [#allocation3], 128, 128, 8
    $region5: #{tpu_custom_call.1} parent=1 // pred_fallthru
      _
    // Predicated region
    $region6: #{tpu_custom_call.1} parent=1 // pred_check
      _
    $region7: #{tpu_custom_call.1} parent=1 // pred_check_branch
      %27 = sbr.rel (0) target = $region9
    $region8: #{tpu_custom_call.1} parent=1 // pred_region
      %s29 = ssub.s32 512, 512
      %30 = vsyncadd [#allocation6], %s29
      %s31 = sshll.u32 [#allocation5], 4
      %s32 = int_to_ptr.vmem [resolvable:$true] %s31
      %37 = dma.hbm_to_vmem [thread:$0]  %s1, 512, %s32, [#allocation6], 128, 128, 8
    $region9: #{tpu_custom_call.1} parent=1 // pred_fallthru
      _
    // Predicated region
    $region10: #{tpu_custom_call.1} parent=1 // pred_check
      _
    $region11: #{tpu_custom_call.1} parent=1 // pred_check_branch
      %39 = sbr.rel (0) target = $region13
    $region12: #{tpu_custom_call.1} parent=1 // pred_region
      %s41 = ssub.s32 16, 16
      %42 = vsyncadd [#allocation6], %s41
      %s44 = sshll.u32 [#allocation7], 4
      %s45 = int_to_ptr.vmem [resolvable:$true] %s44
      %47 = dma.hbm_to_vmem [thread:$0]  %s2, 16, %s45, [#allocation6]
    $region13: #{tpu_custom_call.1} parent=1 // pred_fallthru
      _
    // Predicated region
    $region14: #{tpu_custom_call.1} parent=1 // pred_check
      _
    $region15: #{tpu_custom_call.1} parent=1 // pred_check_branch
      %49 = sbr.rel (0) target = $region17
    $region16: #{tpu_custom_call.1} parent=1 // pred_region
      %s51 = ssub.s32 2048, 2048
      %52 = vsyncadd [#allocation9], %s51
      %s53 = sshll.u32 [#allocation8], 4
      %s54 = int_to_ptr.vmem [resolvable:$true] %s53
      %59 = dma.hbm_to_vmem [thread:$0]  %s3, 2048, %s54, [#allocation9], 128, 128, 8
    $region17: #{tpu_custom_call.1} parent=1 // pred_fallthru
      _
    // Predicated region
    $region18: #{tpu_custom_call.1} parent=1 // pred_check
      _
    $region19: #{tpu_custom_call.1} parent=1 // pred_check_branch
      %61 = sbr.rel (0) target = $region21
    $region20: #{tpu_custom_call.1} parent=1 // pred_region
      %s63 = ssub.s32 16, 16
      %64 = vsyncadd [#allocation9], %s63
      %s66 = sshll.u32 [#allocation10], 4
      %s67 = int_to_ptr.vmem [resolvable:$true] %s66
      %69 = dma.hbm_to_vmem [thread:$0]  %s4, 16, %s67, [#allocation9]
    $region21: #{tpu_custom_call.1} parent=1 // pred_fallthru
      _
    // Predicated region
    $region22: #{tpu_custom_call.1} parent=1 // pred_check
      _
    $region23: #{tpu_custom_call.1} parent=1 // pred_check_branch
      %71 = sbr.rel (0) target = $region25
    $region24: #{tpu_custom_call.1} parent=1 // pred_region
      %72 = dma.done [#allocation3], 256
    $region25: #{tpu_custom_call.1} parent=1 // pred_fallthru
      _
    // Predicated region
    $region26: #{tpu_custom_call.1} parent=1 // pred_check
      _
    $region27: #{tpu_custom_call.1} parent=1 // pred_check_branch
      %74 = sbr.rel (0) target = $region29
    $region28: #{tpu_custom_call.1} parent=1 // pred_region
      %75 = dma.done [#allocation6], 512
    $region29: #{tpu_custom_call.1} parent=1 // pred_fallthru
      _
    // Predicated region
    $region30: #{tpu_custom_call.1} parent=1 // pred_check
      _
    $region31: #{tpu_custom_call.1} parent=1 // pred_check_branch
      %77 = sbr.rel (0) target = $region33
    $region32: #{tpu_custom_call.1} parent=1 // pred_region
      %78 = dma.done [#allocation6], 16
    $region33: #{tpu_custom_call.1} parent=1 // pred_fallthru
      _
    // Predicated region
    $region34: #{tpu_custom_call.1} parent=1 // pred_check
      _
    $region35: #{tpu_custom_call.1} parent=1 // pred_check_branch
      %80 = sbr.rel (0) target = $region37
    $region36: #{tpu_custom_call.1} parent=1 // pred_region
      %81 = dma.done [#allocation9], 2048
    $region37: #{tpu_custom_call.1} parent=1 // pred_fallthru
      _
    // Predicated region
    $region38: #{tpu_custom_call.1} parent=1 // pred_check
      _
    $region39: #{tpu_custom_call.1} parent=1 // pred_check_branch
      %83 = sbr.rel (0) target = $region41
    $region40: #{tpu_custom_call.1} parent=1 // pred_region
      %84 = dma.done [#allocation9], 16
    $region41: #{tpu_custom_call.1} parent=1 // pred_fallthru
      _
    %p85 = scmp.eq.s32.totalorder 0, 0
    // Predicated region
    $region42: #{tpu_custom_call.1} parent=1 // pred_check
      %p86 = pneg %p85
    $region43: #{tpu_custom_call.1} parent=1 // pred_check_branch
      %88 = sbr.rel (%p86) target = $region45
    $region44: #{tpu_custom_call.1} parent=1 // pred_region
      %vm89 = vcmask 261120
      %90 = vst.msk [vmem:[#allocation11] sm:$0xff] %vm89, 0.0
      %91 = vst.msk [vmem:[#allocation11 + $0x8] sm:$0xff] %vm89, 0.0
    $region45: #{tpu_custom_call.1} parent=1 // pred_fallthru
      _
    %v92 = vld [vmem:[#allocation2] sm:$0xff]
    %v93 = vld [vmem:[#allocation2 + $0x8] sm:$0xff]
    %v94 = vld [vmem:[#allocation5] sm:$0xff]
    %v95 = vld [vmem:[#allocation5 + $0x8] sm:$0xff]
    %v96 = vld [vmem:[#allocation5 + $0x10] sm:$0xff]
    %v97 = vld [vmem:[#allocation5 + $0x18] sm:$0xff]
    %v98 = vld [vmem:[#allocation7] sm:$0x1]
    %v100 = vlaneseq
    %v101 = vshrl.u32 %v100, 7
    %v102 = vsub.s32 0, %v101
    %v103 = vrot.slane %v98, %v102
    %vm105 = vcmask 261120
    %v107 = vsel %vm105, %v92, 0
    %v110 = vsel %vm105, %v93, 0
    %112 = vmatprep.subr.mxu0 0.0
    %113 = vmatpush1.msra.mxu0 %v94
    %114 = vmatprep.subr.mxu0 0.0
    %115 = vmatpush1.msra.mxu0 %v95
    %116 = vmatprep.subr.mxu0 0.0
    %117 = vmatpush1.msra.mxu0 %v96
    %118 = vmatprep.subr.mxu0 0.0
    %119 = vmatpush1.msra.mxu0 %v97
    %120 = vmatprep.subr.mxu0 0.0
    %121 = vmatpush1.msra.mxu0 0.0
    %122 = vmatprep.subr.mxu0 0.0
    %123 = vmatpush1.msra.mxu0 0.0
    %124 = vmatprep.subr.mxu0 0.0
    %125 = vmatpush1.msra.mxu0 0.0
    %126 = vmatprep.subr.mxu0 0.0
    %127 = vmatpush1.msra.mxu0 0.0
    %128 = vmatprep.subr.mxu0 0.0
    %129 = vmatpush1.msra.mxu0 0.0
    %130 = vmatprep.subr.mxu0 0.0
    %131 = vmatpush1.msra.mxu0 0.0
    %132 = vmatprep.subr.mxu0 0.0
    %133 = vmatpush1.msra.mxu0 0.0
    %134 = vmatprep.subr.mxu0 0.0
    %135 = vmatpush1.msra.mxu0 0.0
    %136 = vmatprep.subr.mxu0 0.0
    %137 = vmatpush1.msra.mxu0 0.0
    %138 = vmatprep.subr.mxu0 0.0
    %139 = vmatpush1.msra.mxu0 0.0
    %140 = vmatprep.subr.mxu0 0.0
    %141 = vmatpush1.msra.mxu0 0.0
    %142 = vmatprep.subr.mxu0 0.0
    %143 = vmatpush1.msra.mxu0 0.0
    %144 = vmatprep.subr.mxu0 0.0
    %145 = vmatpush1.msra.mxu0 0.0
    %146 = vmatprep.subr.mxu0 0.0
    %147 = vmatpush1.msra.mxu0 0.0
    %148 = vmatprep.subr.mxu0 0.0
    %149 = vmatpush1.msra.mxu0 0.0
    %150 = vmatprep.subr.mxu0 0.0
    %151 = vmatpush1.msra.mxu0 0.0
    %152 = vmatprep.subr.mxu0 0.0
    %153 = vmatpush1.msra.mxu0 0.0
    %154 = vmatprep.subr.mxu0 0.0
    %155 = vmatpush1.msra.mxu0 0.0
    %156 = vmatprep.subr.mxu0 0.0
    %157 = vmatpush1.msra.mxu0 0.0
    %158 = vmatprep.subr.mxu0 0.0
    %159 = vmatpush1.msra.mxu0 0.0
    %160 = vmatprep.subr.mxu0 0.0
    %161 = vmatpush1.msra.mxu0 0.0
    %162 = vmatprep.subr.mxu0 0.0
    %163 = vmatpush1.msra.mxu0 0.0
    %164 = vmatprep.subr.mxu0 0.0
    %165 = vmatpush1.msra.mxu0 0.0
    %166 = vmatprep.subr.mxu0 0.0
    %167 = vmatpush1.msra.mxu0 0.0
    %168 = vmatprep.subr.mxu0 0.0
    %169 = vmatpush1.msra.mxu0 0.0
    %170 = vmatprep.subr.mxu0 0.0
    %171 = vmatpush1.msra.mxu0 0.0
    %172 = vmatprep.subr.mxu0 0.0
    %173 = vmatpush1.msra.mxu0 0.0
    %174 = vmatprep.subr.mxu0 0.0
    %175 = vmatpush1.msra.mxu0 0.0
    %176 = vmatprep.mubr.f32.mxu0 0.0
    %177 = vmatmul.mubr.f32.gmra.mrb[0].mxu0 %v107
    %v178 = vpop.f32.mrb[0].mxu0
    %v179 = vadd.f32 %v103, %v178
    %v180 = vpop.f32.mrb[0].mxu0
    %181 = vmatprep.mubr.f32.mxu0 0.0
    %182 = vmatmul.mubr.f32.gmra.mrb[0].mxu0 %v110
    %v183 = vpop.f32.mrb[0].mxu0
    %v184 = vadd.f32 %v103, %v183
    %v185 = vpop.f32.mrb[0].mxu0
    %186 = vdwg.mxu0
    %v187 = vmax.f32 %v179, 0.0
    %v188 = vmax.f32 %v184, 0.0
    %v189 = vld [vmem:[#allocation11] sm:$0xff]
    %v190 = vld [vmem:[#allocation11 + $0x8] sm:$0xff]
    %v191 = vld [vmem:[#allocation8] sm:$0xff]
    %v192 = vld [vmem:[#allocation8 + $0x8] sm:$0xff]
    %v193 = vld [vmem:[#allocation8 + $0x10] sm:$0xff]
    %v194 = vld [vmem:[#allocation8 + $0x18] sm:$0xff]
    %v195 = vld [vmem:[#allocation8 + $0x20] sm:$0xff]
    %v196 = vld [vmem:[#allocation8 + $0x28] sm:$0xff]
    %v197 = vld [vmem:[#allocation8 + $0x30] sm:$0xff]
    %v198 = vld [vmem:[#allocation8 + $0x38] sm:$0xff]
    %v199 = vld [vmem:[#allocation8 + $0x40] sm:$0xff]
    %v200 = vld [vmem:[#allocation8 + $0x48] sm:$0xff]
    %v201 = vld [vmem:[#allocation8 + $0x50] sm:$0xff]
    %v202 = vld [vmem:[#allocation8 + $0x58] sm:$0xff]
    %v203 = vld [vmem:[#allocation8 + $0x60] sm:$0xff]
    %v204 = vld [vmem:[#allocation8 + $0x68] sm:$0xff]
    %v205 = vld [vmem:[#allocation8 + $0x70] sm:$0xff]
    %v206 = vld [vmem:[#allocation8 + $0x78] sm:$0xff]
    %207 = vmatprep.subr.mxu0 0.0
    %208 = vmatpush1.msra.mxu0 %v191
    %209 = vmatprep.subr.mxu0 0.0
    %210 = vmatpush1.msra.mxu0 %v192
    %211 = vmatprep.subr.mxu0 0.0
    %212 = vmatpush1.msra.mxu0 %v193
    %213 = vmatprep.subr.mxu0 0.0
    %214 = vmatpush1.msra.mxu0 %v194
    %215 = vmatprep.subr.mxu0 0.0
    %216 = vmatpush1.msra.mxu0 %v195
    %217 = vmatprep.subr.mxu0 0.0
    %218 = vmatpush1.msra.mxu0 %v196
    %219 = vmatprep.subr.mxu0 0.0
    %220 = vmatpush1.msra.mxu0 %v197
    %221 = vmatprep.subr.mxu0 0.0
    %222 = vmatpush1.msra.mxu0 %v198
    %223 = vmatprep.subr.mxu0 0.0
    %224 = vmatpush1.msra.mxu0 %v199
    %225 = vmatprep.subr.mxu0 0.0
    %226 = vmatpush1.msra.mxu0 %v200
    %227 = vmatprep.subr.mxu0 0.0
    %228 = vmatpush1.msra.mxu0 %v201
    %229 = vmatprep.subr.mxu0 0.0
    %230 = vmatpush1.msra.mxu0 %v202
    %231 = vmatprep.subr.mxu0 0.0
    %232 = vmatpush1.msra.mxu0 %v203
    %233 = vmatprep.subr.mxu0 0.0
    %234 = vmatpush1.msra.mxu0 %v204
    %235 = vmatprep.subr.mxu0 0.0
    %236 = vmatpush1.msra.mxu0 %v205
    %237 = vmatprep.subr.mxu0 0.0
    %238 = vmatpush1.msra.mxu0 %v206
    %239 = vmatprep.subr.mxu0 0.0
    %240 = vmatpush1.msra.mxu0 0.0
    %241 = vmatprep.subr.mxu0 0.0
    %242 = vmatpush1.msra.mxu0 0.0
    %243 = vmatprep.subr.mxu0 0.0
    %244 = vmatpush1.msra.mxu0 0.0
    %245 = vmatprep.subr.mxu0 0.0
    %246 = vmatpush1.msra.mxu0 0.0
    %247 = vmatprep.subr.mxu0 0.0
    %248 = vmatpush1.msra.mxu0 0.0
    %249 = vmatprep.subr.mxu0 0.0
    %250 = vmatpush1.msra.mxu0 0.0
    %251 = vmatprep.subr.mxu0 0.0
    %252 = vmatpush1.msra.mxu0 0.0
    %253 = vmatprep.subr.mxu0 0.0
    %254 = vmatpush1.msra.mxu0 0.0
    %255 = vmatprep.subr.mxu0 0.0
    %256 = vmatpush1.msra.mxu0 0.0
    %257 = vmatprep.subr.mxu0 0.0
    %258 = vmatpush1.msra.mxu0 0.0
    %259 = vmatprep.subr.mxu0 0.0
    %260 = vmatpush1.msra.mxu0 0.0
    %261 = vmatprep.subr.mxu0 0.0
    %262 = vmatpush1.msra.mxu0 0.0
    %263 = vmatprep.subr.mxu0 0.0
    %264 = vmatpush1.msra.mxu0 0.0
    %265 = vmatprep.subr.mxu0 0.0
    %266 = vmatpush1.msra.mxu0 0.0
    %267 = vmatprep.subr.mxu0 0.0
    %268 = vmatpush1.msra.mxu0 0.0
    %269 = vmatprep.subr.mxu0 0.0
    %270 = vmatpush1.msra.mxu0 0.0
    %271 = vmatprep.mubr.f32.mxu0 0.0
    %272 = vmatmul.mubr.f32.gmra.mrb[0].mxu0 %v187
    %v273 = vpop.f32.mrb[0].mxu0
    %v274 = vadd.f32 0.0, %v273
    %v275 = vpop.f32.mrb[0].mxu0
    %276 = vmatprep.mubr.f32.mxu0 0.0
    %277 = vmatmul.mubr.f32.gmra.mrb[0].mxu0 %v188
    %v278 = vpop.f32.mrb[0].mxu0
    %v279 = vadd.f32 0.0, %v278
    %v280 = vpop.f32.mrb[0].mxu0
    %281 = vdwg.mxu0
    %v282 = vadd.f32 %v189, %v274
    %v283 = vadd.f32 %v190, %v279
    %284 = vst.msk [vmem:[#allocation11] sm:$0xff] %vm105, %v282
    %285 = vst.msk [vmem:[#allocation11 + $0x8] sm:$0xff] %vm105, %v283
    // Predicated region
    $region46: #{tpu_custom_call.1} parent=1 // pred_check
      %p286 = pneg %p85
    $region47: #{tpu_custom_call.1} parent=1 // pred_check_branch
      %288 = sbr.rel (%p286) target = $region49
    $region48: #{tpu_custom_call.1} parent=1 // pred_region
      %v289 = vld [vmem:[#allocation11] sm:$0xff]
      %v290 = vld [vmem:[#allocation11 + $0x8] sm:$0xff]
      %v291 = vld [vmem:[#allocation10] sm:$0x1]
      %v293 = vlaneseq
      %v294 = vshrl.u32 %v293, 7
      %v295 = vsub.s32 0, %v294
      %v296 = vrot.slane %v291, %v295
      %v298 = vadd.f32 %v289, %v296
      %v299 = vadd.f32 %v290, %v296
      %300 = vst.msk [vmem:[#allocation11] sm:$0xff] %vm105, %v298
      %301 = vst.msk [vmem:[#allocation11 + $0x8] sm:$0xff] %vm105, %v299
    $region49: #{tpu_custom_call.1} parent=1 // pred_fallthru
      _
    // Predicated region
    $region50: #{tpu_custom_call.1} parent=1 // pred_check
      _
    $region51: #{tpu_custom_call.1} parent=1 // pred_check_branch
      %303 = sbr.rel (0) target = $region53
    $region52: #{tpu_custom_call.1} parent=1 // pred_region
      %s305 = ssub.s32 256, 256
      %306 = vsyncadd [#allocation4], %s305
      %s307 = sshll.u32 [#allocation11], 4
      %s308 = int_to_ptr.vmem [resolvable:$true] %s307
      %313 = dma.vmem_to_hbm [thread:$0]  %s308, 256, %s5, [#allocation4], 128, 128, 8
    $region53: #{tpu_custom_call.1} parent=1 // pred_fallthru
      _
    // Predicated region
    $region54: #{tpu_custom_call.1} parent=1 // pred_check
      _
    $region55: #{tpu_custom_call.1} parent=1 // pred_check_branch
      %315 = sbr.rel (0) target = $region57
    $region56: #{tpu_custom_call.1} parent=1 // pred_region
      %316 = dma.done [#allocation4], 256
    $region57: #{tpu_custom_call.1} parent=1 // pred_fallthru
      _
    %317 = vsyncpa [#allocation3], 1
    %318 = vsyncpa [#allocation6], 1
    %319 = vsyncpa [#allocation9], 1
    %320 = vsyncpa [#allocation4], 1

</llo_original>
